<compile_context>
chip_gen: v5e
topology: v5e:2x2
jax: 0.10.0
libtpu: 0.0.40
codegen_flags: <defaults>
</compile_context>

<pallas_src>
import jax
import jax.numpy as jnp
from jax.experimental import pallas as pl
from jax.experimental.pallas import tpu as pltpu

F_IN = 5    # `inputs`
F_OUT = 4   # `outputs`


def _round_up(n, m):
    return ((n + m - 1) // m) * m


def net_kernel(xt_ref, w_ref, b_ref, y_ref):
    # xt_ref: (F_IN, TB)        -- batch on lanes (lane-dense)
    # w_ref : (2*F_OUT, F_IN)   -- [2*W_ctrl; W_net] stacked (PyTorch (out,in))
    # b_ref : (2*F_OUT, 1)      -- [2*b_ctrl; b_net]
    # y_ref : (2*F_OUT, TB)     -- fused slab: rows [0:4]=f_next, [4:8]=out
    xt = xt_ref[...]                                               # (5, TB) f32

    # One fused MXU matmul for both Linear layers: (8,5) @ (5,TB) -> (8,TB).
    y = jnp.dot(w_ref[...], xt, preferred_element_type=jnp.float32) + b_ref[...]

    # `out` half is final already -- store it directly (no concat / extra slab).
    y_ref[F_OUT:2 * F_OUT, :] = y[F_OUT:, :]

    # f_next = x[:, :-1]**2 - x[:, :-1] + 2*ctrl  (2.0 folded into w/b).
    xm = xt[:F_IN - 1, :]                                          # (4, TB)
    y_ref[0:F_OUT, :] = xm * xm - xm + y[:F_OUT, :]


def net_forward(x, w_ctrl, b_ctrl, w_net, b_net, *, tile_b=65536):
    """x: (B, 5) f32.  w_*: PyTorch layout (4, 5) f32.  b_*: (4,) f32.

    Returns (f_next, out), each (B, 4) f32.
    """
    B = x.shape[0]

    # --- parameter fusion (tiny arrays; negligible cost) --------------------
    # Fold the 2.0 factor into the ctrl half (bit-exact in f32).
    w_fused = jnp.concatenate([2.0 * w_ctrl, w_net], axis=0).astype(jnp.float32)   # (8, 5)
    b_fused = jnp.concatenate([2.0 * b_ctrl, b_net], axis=0).astype(
        jnp.float32).reshape(2 * F_OUT, 1)                                          # (8, 1)

    # --- single input layout pass: batch on lanes ---------------------------
    xt = x.astype(jnp.float32).T                                                    # (5, B)

    # --- tile selection (multiple of 128 lanes, no padding pass) ------------
    tb = min(int(tile_b), _round_up(max(B, 1), 128))
    tb = max(tb, 128)
    grid_n = pl.cdiv(B, tb)
    # Keep >=2 grid steps when the batch is big enough (megacore on v7x).
    if grid_n == 1 and B > 256:
        tb = max(128, _round_up(pl.cdiv(B, 2), 128))
        grid_n = pl.cdiv(B, tb)

    y = pl.pallas_call(
        net_kernel,
        out_shape=jax.ShapeDtypeStruct((2 * F_OUT, B), jnp.float32),
        grid=(grid_n,),
        in_specs=[
            pl.BlockSpec((F_IN, tb), lambda i: (0, i)),            # x^T, tiled on batch
            pl.BlockSpec((2 * F_OUT, F_IN), lambda i: (0, 0)),     # fused weight, resident
            pl.BlockSpec((2 * F_OUT, 1), lambda i: (0, 0)),        # fused bias, resident
        ],
        out_specs=pl.BlockSpec((2 * F_OUT, tb), lambda i: (0, i)), # fused lane-dense slab
        compiler_params=pltpu.CompilerParams(
            dimension_semantics=("parallel",),                     # megacore on v7x
            vmem_limit_bytes=48 * 1024 * 1024,                     # fits v7x 64MiB, lifts v5e 16MiB default
        ),
        cost_estimate=pl.CostEstimate(
            flops=2 * (2 * F_OUT) * F_IN * B,
            bytes_accessed=(F_IN + 2 * F_OUT) * 4 * B,
            transcendentals=0,
        ),
    )(xt, w_fused, b_fused)

    # --- single output layout pass, then cheap column splits -----------------
    yt = y.T                                                       # (B, 8)
    f_next = yt[:, :F_OUT]
    out = yt[:, F_OUT:]
    return f_next, out


def init_linear_params(key, in_features, out_features):
    """PyTorch-Linear-style init: U(-1/sqrt(in), 1/sqrt(in)).

    Returns (weight, bias) in PyTorch layout: weight (out, in), bias (out,).
    """
    k_w, k_b = jax.random.split(key)
    bound = 1.0 / jnp.sqrt(jnp.float32(in_features))
    w = jax.random.uniform(k_w, (out_features, in_features), jnp.float32,
                           minval=-bound, maxval=bound)
    b = jax.random.uniform(k_b, (out_features,), jnp.float32,
                           minval=-bound, maxval=bound)
    return w, b


def reference_forward(x, w_ctrl, b_ctrl, w_net, b_net):
    ctrl = x @ w_ctrl.T + b_ctrl
    xm = x[:, :-1]
    f_next = xm ** 2 - xm + 2.0 * ctrl
    out = x @ w_net.T + b_net
    return f_next, out


if __name__ == "__main__":
    key = jax.random.PRNGKey(0)
    k_x, k_c, k_n = jax.random.split(key, 3)

    B = 8
    x = jax.random.normal(k_x, (B, F_IN), jnp.float32)

    w_ctrl, b_ctrl = init_linear_params(k_c, F_IN, F_OUT)
    w_net, b_net = init_linear_params(k_n, F_IN, F_OUT)

    fwd = jax.jit(net_forward)
    f_next, out = fwd(x, w_ctrl, b_ctrl, w_net, b_net)
    jax.block_until_ready((f_next, out))

    f_ref, o_ref = reference_forward(x, w_ctrl, b_ctrl, w_net, b_net)
    assert jnp.allclose(f_next, f_ref, atol=1e-5, rtol=1e-5), "f_next mismatch"
    assert jnp.allclose(out, o_ref, atol=1e-5, rtol=1e-5), "out mismatch"

    # TODO(synk): Net.train (AdamW optimization loop) is not part of forward
    # and is intentionally not implemented as a kernel.

    print("KERNEL_OK")
</pallas_src>

<mosaic_0001>
module attributes {stable_mosaic.version = 11 : i64} {
  func.func @net_kernel(%arg0: i32, %arg1: memref<5x128xf32, #tpu.memory_space<vmem>>, %arg2: memref<8x5xf32, #tpu.memory_space<vmem>>, %arg3: memref<8x1xf32, #tpu.memory_space<vmem>>, %arg4: memref<8x128xf32, #tpu.memory_space<vmem>>) attributes {dimension_semantics = [#tpu.dimension_semantics<parallel>], iteration_bounds = array<i64: 1>, scalar_prefetch = 0 : i64, scratch_operands = 0 : i64, tpu.core_type = #tpu.core_type<tc>, window_params = [{transform_indices = @transform_0, window_bounds = array<i64: 5, 128>}, {pipeline_mode = #tpu.pipeline_mode<synchronous>, transform_indices = @transform_1, window_bounds = array<i64: 8, 5>}, {pipeline_mode = #tpu.pipeline_mode<synchronous>, transform_indices = @transform_2, window_bounds = array<i64: 8, 1>}, {transform_indices = @transform_3, window_bounds = array<i64: 8, 128>}]} {
    %c0 = arith.constant 0 : index
    %c0_0 = arith.constant 0 : index
    %0 = vector.load %arg1[%c0, %c0_0] : memref<5x128xf32, #tpu.memory_space<vmem>>, vector<5x128xf32>
    %c0_1 = arith.constant 0 : index
    %c0_2 = arith.constant 0 : index
    %1 = vector.load %arg2[%c0_1, %c0_2] : memref<8x5xf32, #tpu.memory_space<vmem>>, vector<8x5xf32>
    %cst = arith.constant dense<0.000000e+00> : vector<8x128xf32>
    %2 = tpu.matmul %1, %0, %cst {dimension_numbers = #tpu.dot_dimension_numbers<[1], [0], [0], [1], [0, 0, 1, 1], [], []>} : vector<8x5xf32>, vector<5x128xf32>, vector<8x128xf32> -> vector<8x128xf32>
    %c0_3 = arith.constant 0 : index
    %c0_4 = arith.constant 0 : index
    %3 = vector.load %arg3[%c0_3, %c0_4] : memref<8x1xf32, #tpu.memory_space<vmem>>, vector<8x1xf32>
    %4 = vector.broadcast %3 : vector<8x1xf32> to vector<8x128xf32>
    %5 = arith.addf %2, %4 : vector<8x128xf32>
    %6 = vector.extract_strided_slice %5 {offsets = [4, 0], sizes = [4, 128], strides = [1, 1]} : vector<8x128xf32> to vector<4x128xf32>
    %c4 = arith.constant 4 : index
    %c0_5 = arith.constant 0 : index
    %7 = vector.load %arg4[%c4, %c0_5] : memref<8x128xf32, #tpu.memory_space<vmem>>, vector<4x128xf32>
    tpu.vector_store %arg4[%c4, %c0_5], %6 {strides = array<i32>} : memref<8x128xf32, #tpu.memory_space<vmem>>, vector<4x128xf32>,
    %8 = vector.extract_strided_slice %0 {offsets = [0, 0], sizes = [4, 128], strides = [1, 1]} : vector<5x128xf32> to vector<4x128xf32>
    %9 = arith.mulf %8, %8 : vector<4x128xf32>
    %10 = arith.subf %9, %8 : vector<4x128xf32>
    %11 = vector.extract_strided_slice %5 {offsets = [0, 0], sizes = [4, 128], strides = [1, 1]} : vector<8x128xf32> to vector<4x128xf32>
    %12 = arith.addf %10, %11 : vector<4x128xf32>
    %c0_6 = arith.constant 0 : index
    %c0_7 = arith.constant 0 : index
    %13 = vector.load %arg4[%c0_6, %c0_7] : memref<8x128xf32, #tpu.memory_space<vmem>>, vector<4x128xf32>
    tpu.vector_store %arg4[%c0_6, %c0_7], %12 {strides = array<i32>} : memref<8x128xf32, #tpu.memory_space<vmem>>, vector<4x128xf32>,
    return
  }
  func.func @transform_0(%arg0: i32) -> (i32, i32) {
    %c0_i32 = arith.constant 0 : i32
    %c0_i32_0 = arith.constant 0 : i32
    return %c0_i32, %arg0 : i32, i32
  }
  func.func @transform_1(%arg0: i32) -> (i32, i32) {
    %c0_i32 = arith.constant 0 : i32
    %c0_i32_0 = arith.constant 0 : i32
    %c0_i32_1 = arith.constant 0 : i32
    return %c0_i32, %c0_i32_0 : i32, i32
  }
  func.func @transform_2(%arg0: i32) -> (i32, i32) {
    %c0_i32 = arith.constant 0 : i32
    %c0_i32_0 = arith.constant 0 : i32
    %c0_i32_1 = arith.constant 0 : i32
    return %c0_i32, %c0_i32_0 : i32, i32
  }
  func.func @transform_3(%arg0: i32) -> (i32, i32) {
    %c0_i32 = arith.constant 0 : i32
    %c0_i32_0 = arith.constant 0 : i32
    return %c0_i32, %arg0 : i32, i32
  }
}

</mosaic_0001>

<llo_original>
// kernel: net_forward.1
$region0: #{net_forward.1}
  #allocation0 [shape = 'u32[]', space=smem, size = 0x4, offset = 0x4, fixed_abs, tag = 'smem constant byte address 0x4 - core index']
  #allocation1 [shape = 'u32[72,128]{1,0:T(1,128)}', space=vmem, size = 0x9000, scoped, tag = 'internal scratch']
  %s0 = inlined_call_operand.vmem [shape: f32[5,8], index: 0, kind: input, shape index: {}]
  %s1 = inlined_call_operand.vmem [shape: f32[8,5], index: 1, kind: input, shape index: {}]
  %s2 = inlined_call_operand.vmem [shape: f32[8,1], index: 2, kind: input, shape index: {}]
  %s3 = inlined_call_operand.vmem [shape: f32[8,8], index: 3, kind: output, shape index: {}]
  %s4 = sld [smem:[#allocation0]]
  $region22: #{net_forward.1} parent=0
    _
  %s6 = ssub.s32 1, %s4
  %s7 = scalar_select 0, %s6, %s4
  // Predicated region
  $region2: #{net_forward.1} parent=0 // pred_check
    _
  $region3: #{net_forward.1} parent=0 // pred_check_branch
    %9 = sbr.rel (0) target = $region5
  $region4: #{net_forward.1} parent=0 // pred_region
    _
  $region5: #{net_forward.1} parent=0 // pred_fallthru
    _
  // Predicated region
  $region6: #{net_forward.1} parent=0 // pred_check
    _
  $region7: #{net_forward.1} parent=0 // pred_check_branch
    %11 = sbr.rel (0) target = $region9
  $region8: #{net_forward.1} parent=0 // pred_region
    _
  $region9: #{net_forward.1} parent=0 // pred_fallthru
    _
  // Predicated region
  $region10: #{net_forward.1} parent=0 // pred_check
    _
  $region11: #{net_forward.1} parent=0 // pred_check_branch
    %13 = sbr.rel (0) target = $region13
  $region12: #{net_forward.1} parent=0 // pred_region
    _
  $region13: #{net_forward.1} parent=0 // pred_fallthru
    _
  %v14 = vld [vmem:[%s0] sm:$0x1f]
  %v15 = vld [vmem:[%s1] sm:$0xff]
  %v16 = vld [vmem:[%s2] sm:$0xff]
  %18 = vset.pattern.permute.xlu0 0
  %19 = vperm.xlu0 %18, %v16
  %v20 = vpop.permute.xlu0 %19
  %vm22 = vcmask 39936
  %v24 = vsel %vm22, %v15, 0
  %vm26 = vcmask 1044480
  %v28 = vsel %vm26, %v14, 0
  %30 = vmatpush.msra.mxu0 0.0
  %31 = vmatpush.msra.mxu0 0.0
  %32 = vmatpush.msra.mxu0 0.0
  %33 = vmatpush.msra.mxu0 0.0
  %34 = vmatpush.msra.mxu0 0.0
  %35 = vmatpush.msra.mxu0 0.0
  %36 = vmatpush.msra.mxu0 0.0
  %37 = vmatpush.msra.mxu0 0.0
  %38 = vmatpush.msra.mxu0 0.0
  %39 = vmatpush.msra.mxu0 0.0
  %40 = vmatpush.msra.mxu0 0.0
  %41 = vmatpush.msra.mxu0 0.0
  %42 = vmatpush.msra.mxu0 0.0
  %43 = vmatpush.msra.mxu0 0.0
  %44 = vmatpush.msra.mxu0 0.0
  %45 = vmatpush.msra.mxu0 %v28
  %46 = vmatmul.f32.gmra.mxu0 %v24
  %v47 = vpop.f32.mrf.mxu0
  %v48 = vadd.f32 %v20, %v47
  %49 = vdwg.mxu0
  %50 = vst [vmem:[%s3] sm:$0xf0] %v48
  %v51 = vmul.f32 %v14, %v14
  %v52 = vsub.f32 %v51, %v14
  %v53 = vadd.f32 %v52, %v48
  %54 = vst [vmem:[%s3] sm:$0xf] %v53
  // Predicated region
  $region14: #{net_forward.1} parent=0 // pred_check
    _
  $region15: #{net_forward.1} parent=0 // pred_check_branch
    %56 = sbr.rel (0) target = $region17
  $region16: #{net_forward.1} parent=0 // pred_region
    _
  $region17: #{net_forward.1} parent=0 // pred_fallthru
    _
  // Predicated region
  $region18: #{net_forward.1} parent=0 // pred_check
    _
  $region19: #{net_forward.1} parent=0 // pred_check_branch
    %58 = sbr.rel (0) target = $region21
  $region20: #{net_forward.1} parent=0 // pred_region
    _
  $region21: #{net_forward.1} parent=0 // pred_fallthru
    _

</llo_original>
